<compile_context>
chip_gen: v6e
topology: v6e:2x2x1
jax: 0.10.0
libtpu: 0.0.40
codegen_flags: <defaults>
</compile_context>

<pallas_src>
import functools
import math

import jax
import jax.numpy as jnp
from jax import lax
from jax.experimental import pallas as pl
from jax.experimental.pallas import tpu as pltpu


_NEG_BIG = -1e30  # large finite negative; safe stand-in for -inf when tiling


# --------------------------------------------------------------------------- #
# Stage 1: fused Q/K/V projection into head-major (B, H, T, d_out).
# --------------------------------------------------------------------------- #
def _qkv_proj_kernel(x_ref, wq_ref, wk_ref, wv_ref, q_ref, k_ref, v_ref, *,
                     scale):
    x = x_ref[0]                                                # (tp, d_in)
    q = jnp.dot(x, wq_ref[0], preferred_element_type=jnp.float32) * scale
    k = jnp.dot(x, wk_ref[0], preferred_element_type=jnp.float32)
    v = jnp.dot(x, wv_ref[0], preferred_element_type=jnp.float32)
    q_ref[0, 0] = q.astype(q_ref.dtype)
    k_ref[0, 0] = k.astype(k_ref.dtype)
    v_ref[0, 0] = v.astype(v_ref.dtype)


# --------------------------------------------------------------------------- #
# Stage 2: flash (online-softmax) causal attention; one head per grid point.
# --------------------------------------------------------------------------- #
def _flash_attn_kernel(q_ref, k_ref, v_ref, o_ref, m_scr, l_scr, acc_scr, *,
                       block_q, block_k):
    ki = pl.program_id(3)
    nk = pl.num_programs(3)
    q_start = pl.program_id(2) * block_q
    k_start = ki * block_k

    @pl.when(ki == 0)
    def _init():
        m_scr[...] = jnp.full_like(m_scr, _NEG_BIG)
        l_scr[...] = jnp.zeros_like(l_scr)
        acc_scr[...] = jnp.zeros_like(acc_scr)

    # Skip kv tiles lying entirely above the causal diagonal. Their data fetch
    # is also skipped: the kv index_map clamps them to the last valid tile, so
    # the pipeline sees a repeated block index and elides the DMA.
    @pl.when(k_start <= q_start + block_q - 1)
    def _compute():
        q = q_ref[0, 0]                                         # (tq, d)
        k = k_ref[0, 0]                                         # (tk, d)
        v = v_ref[0, 0]                                         # (tk, d)

        # scores = q @ k^T (1/sqrt(d) already folded into q), f32 accumulate.
        s = lax.dot_general(q, k, (((1,), (1,)), ((), ())),
                            preferred_element_type=jnp.float32)  # (tq, tk)
        row = q_start + lax.broadcasted_iota(jnp.int32, s.shape, 0)
        col = k_start + lax.broadcasted_iota(jnp.int32, s.shape, 1)
        s = jnp.where(col > row, _NEG_BIG, s)                   # strict upper tri

        m_prev = m_scr[...]                                     # (tq, 1)
        m_new = jnp.maximum(m_prev, jnp.max(s, axis=-1, keepdims=True))
        alpha = jnp.exp(m_prev - m_new)
        p = jnp.exp(s - m_new)                                  # (tq, tk) f32
        l_scr[...] = alpha * l_scr[...] + jnp.sum(p, axis=-1, keepdims=True)
        acc_scr[...] = alpha * acc_scr[...] + jnp.dot(
            p.astype(v.dtype), v, preferred_element_type=jnp.float32)
        m_scr[...] = m_new

    @pl.when(ki == nk - 1)
    def _finalize():
        inv_l = pl.reciprocal(l_scr[...], approx=True)          # EUP, ~free slot
        out = (acc_scr[...] * inv_l).astype(o_ref.dtype)        # (tq, d)
        o_ref[...] = out.reshape(o_ref.shape)                   # single store


def multi_head_attention_wrapper(x, wq, wk, wv, *, block_q=128, block_k=128,
                                 compute_dtype=None, vmem_limit_bytes=None):
    """x: (B, T, d_in); wq/wk/wv: (H, d_in, d_out). Returns (B, T, H*d_out).

    block_q/block_k: sweepable (128 is right for v5e; try 256 on v6e/v7x,
    re-checking VMEM on v7x). compute_dtype=jnp.bfloat16 runs all matmuls in
    bf16 (softmax state stays f32).
    """
    B, T, d_in = x.shape
    H, _, d_out = wq.shape
    out_dtype = x.dtype
    cdt = jnp.dtype(compute_dtype) if compute_dtype is not None else x.dtype

    tq = min(block_q, T)
    tk = min(block_k, T)
    if T % tq or T % tk:
        # TODO(synk): pad the sequence to a tile multiple instead of raising.
        raise ValueError(f"T={T} must be divisible by tile sizes ({tq}, {tk})")

    scale = 1.0 / math.sqrt(d_out)
    xc = x.astype(cdt)
    wqc, wkc, wvc = (w.astype(cdt) for w in (wq, wk, wv))

    # ---- Stage 1: project Q/K/V once, head-major layout, scale folded in. ----
    tp = tq
    qkv_struct = jax.ShapeDtypeStruct((B, H, T, d_out), cdt)
    q, k, v = pl.pallas_call(
        functools.partial(_qkv_proj_kernel, scale=scale),
        out_shape=(qkv_struct, qkv_struct, qkv_struct),
        grid_spec=pltpu.PrefetchScalarGridSpec(
            num_scalar_prefetch=0,
            grid=(B, H, T // tp),
            in_specs=[
                pl.BlockSpec((1, tp, d_in), lambda b, h, ti: (b, ti, 0)),
                pl.BlockSpec((1, d_in, d_out), lambda b, h, ti: (h, 0, 0)),
                pl.BlockSpec((1, d_in, d_out), lambda b, h, ti: (h, 0, 0)),
                pl.BlockSpec((1, d_in, d_out), lambda b, h, ti: (h, 0, 0)),
            ],
            out_specs=[
                pl.BlockSpec((1, 1, tp, d_out), lambda b, h, ti: (b, h, ti, 0)),
                pl.BlockSpec((1, 1, tp, d_out), lambda b, h, ti: (b, h, ti, 0)),
                pl.BlockSpec((1, 1, tp, d_out), lambda b, h, ti: (b, h, ti, 0)),
            ],
        ),
        compiler_params=pltpu.CompilerParams(
            dimension_semantics=("parallel", "parallel", "parallel"),
            vmem_limit_bytes=vmem_limit_bytes),
    )(xc, wqc, wkc, wvc)

    # ---- Stage 2: flash attention over (B, H, q_tiles, kv_tiles). ----
    nq, nkv = T // tq, T // tk

    def kv_index_map(b, h, qi, ki):
        # Clamp above-diagonal kv tiles to the last causally valid tile: the
        # repeated block index lets the pipeline skip their DMA entirely.
        last_valid = ((qi + 1) * tq - 1) // tk
        return (b, h, jnp.minimum(ki, last_valid), 0)

    if d_out % 128 == 0:
        # Lane-dense direct write into the concatenated (B, T, H*d_out) layout.
        out_struct = jax.ShapeDtypeStruct((B, T, H * d_out), out_dtype)
        out_spec = pl.BlockSpec((1, tq, d_out), lambda b, h, qi, ki: (b, qi, h))
        merge_heads = False
    else:
        # d_out below one lane tile: keep head-major blocks in the kernel and
        # do the concat as a cheap XLA transpose+reshape on the small output.
        out_struct = jax.ShapeDtypeStruct((B, H, T, d_out), out_dtype)
        out_spec = pl.BlockSpec((1, 1, tq, d_out),
                                lambda b, h, qi, ki: (b, h, qi, 0))
        merge_heads = True

    out = pl.pallas_call(
        functools.partial(_flash_attn_kernel, block_q=tq, block_k=tk),
        out_shape=out_struct,
        grid_spec=pltpu.PrefetchScalarGridSpec(
            num_scalar_prefetch=0,
            grid=(B, H, nq, nkv),
            in_specs=[
                pl.BlockSpec((1, 1, tq, d_out),
                             lambda b, h, qi, ki: (b, h, qi, 0)),   # Q
                pl.BlockSpec((1, 1, tk, d_out), kv_index_map),      # K
                pl.BlockSpec((1, 1, tk, d_out), kv_index_map),      # V
            ],
            out_specs=out_spec,
            scratch_shapes=[
                pltpu.VMEM((tq, 1), jnp.float32),      # running max m
                pltpu.VMEM((tq, 1), jnp.float32),      # running denom l
                pltpu.VMEM((tq, d_out), jnp.float32),  # running context acc
            ],
        ),
        compiler_params=pltpu.CompilerParams(
            dimension_semantics=("parallel", "parallel", "parallel",
                                 "arbitrary"),
            vmem_limit_bytes=vmem_limit_bytes),
    )(q, k, v)

    if merge_heads:
        out = jnp.transpose(out, (0, 2, 1, 3)).reshape(B, T, H * d_out)
    return out


def _reference(x, wq, wk, wv):
    """Pure-JAX reference matching the PyTorch module (f32)."""
    _, T, _ = x.shape
    H, _, d_out = wq.shape
    mask = jnp.triu(jnp.ones((T, T), dtype=bool), k=1)
    outs = []
    for h in range(H):
        q = x @ wq[h]
        k = x @ wk[h]
        v = x @ wv[h]
        s = jnp.einsum("btd,bsd->bts", q, k)
        s = jnp.where(mask[None], -jnp.inf, s)
        w = jax.nn.softmax(s / math.sqrt(d_out), axis=-1)
        outs.append(jnp.einsum("bts,bsd->btd", w, v))
    return jnp.concatenate(outs, axis=-1)


if __name__ == "__main__":
    # --- 1) Shapes from the PyTorch module: batch=2, context_length=6,
    #        d_in=3, d_out=2 per head, num_heads=2, dropout=0.0. ---
    inputs = jnp.array([[0.43, 0.15, 0.89],
                        [0.55, 0.87, 0.66],
                        [0.57, 0.85, 0.64],
                        [0.22, 0.58, 0.33],
                        [0.77, 0.25, 0.10],
                        [0.05, 0.80, 0.55]], dtype=jnp.float32)
    x_small = jnp.stack([inputs, inputs], axis=0)            # (2, 6, 3)
    B, T, d_in = x_small.shape
    d_out, H = 2, 2

    key = jax.random.PRNGKey(0)
    kq, kk, kv, _ = jax.random.split(key, 4)
    bound = 1.0 / math.sqrt(d_in)   # nn.Linear(bias=False) default init range
    wq = jax.random.uniform(kq, (H, d_in, d_out), minval=-bound, maxval=bound)
    wk = jax.random.uniform(kk, (H, d_in, d_out), minval=-bound, maxval=bound)
    wv = jax.random.uniform(kv, (H, d_in, d_out), minval=-bound, maxval=bound)

    out = jax.block_until_ready(multi_head_attention_wrapper(x_small, wq, wk, wv))
    ref = _reference(x_small, wq, wk, wv)
    assert out.shape == (B, T, H * d_out), out.shape
    err = float(jnp.max(jnp.abs(out - ref)))
    assert jnp.allclose(out, ref, atol=2e-3, rtol=2e-3), err

    # --- 2) Tiled flash path: 2 q-tiles x 2 kv-tiles per head, including an
    #        above-diagonal kv tile whose DMA and compute are both skipped. ---
    B2, T2, d_in2, d_out2, H2 = 2, 256, 8, 4, 2
    k1, k2, k3, k4 = jax.random.split(jax.random.PRNGKey(0), 4)
    x2 = jax.random.uniform(k1, (B2, T2, d_in2), dtype=jnp.float32)
    b2 = 1.0 / math.sqrt(d_in2)
    wq2 = jax.random.uniform(k2, (H2, d_in2, d_out2), minval=-b2, maxval=b2)
    wk2 = jax.random.uniform(k3, (H2, d_in2, d_out2), minval=-b2, maxval=b2)
    wv2 = jax.random.uniform(k4, (H2, d_in2, d_out2), minval=-b2, maxval=b2)

    out2 = jax.block_until_ready(
        multi_head_attention_wrapper(x2, wq2, wk2, wv2,
                                     block_q=128, block_k=128))
    ref2 = _reference(x2, wq2, wk2, wv2)
    err2 = float(jnp.max(jnp.abs(out2 - ref2)))
    assert out2.shape == (B2, T2, H2 * d_out2), out2.shape
    assert jnp.allclose(out2, ref2, atol=2e-3, rtol=2e-3), err2

    # --- 3) bf16 matmul path (operands bf16, softmax state f32). ---
    out3 = jax.block_until_ready(
        multi_head_attention_wrapper(x2, wq2, wk2, wv2, block_q=128,
                                     block_k=128,
                                     compute_dtype=jnp.bfloat16))
    err3 = float(jnp.max(jnp.abs(out3 - ref2)))
    assert out3.shape == (B2, T2, H2 * d_out2), out3.shape
    assert jnp.allclose(out3, ref2, atol=3e-2, rtol=3e-2), err3

    print("KERNEL_OK")
</pallas_src>

<mosaic_0001>
module attributes {stable_mosaic.version = 11 : i64} {
  func.func @_qkv_proj_kernel(%arg0: i32, %arg1: i32, %arg2: i32, %arg3: memref<1x6x3xf32, #tpu.memory_space<vmem>>, %arg4: memref<1x3x2xf32, #tpu.memory_space<vmem>>, %arg5: memref<1x3x2xf32, #tpu.memory_space<vmem>>, %arg6: memref<1x3x2xf32, #tpu.memory_space<vmem>>, %arg7: memref<1x1x6x2xf32, #tpu.memory_space<vmem>>, %arg8: memref<1x1x6x2xf32, #tpu.memory_space<vmem>>, %arg9: memref<1x1x6x2xf32, #tpu.memory_space<vmem>>) attributes {dimension_semantics = [#tpu.dimension_semantics<parallel>, #tpu.dimension_semantics<parallel>, #tpu.dimension_semantics<parallel>], iteration_bounds = array<i64: 2, 2, 1>, scalar_prefetch = 0 : i64, scratch_operands = 0 : i64, tpu.core_type = #tpu.core_type<tc>, window_params = [{transform_indices = @transform_0, window_bounds = array<i64: 1, 6, 3>}, {transform_indices = @transform_1, window_bounds = array<i64: 1, 3, 2>}, {transform_indices = @transform_2, window_bounds = array<i64: 1, 3, 2>}, {transform_indices = @transform_3, window_bounds = array<i64: 1, 3, 2>}, {transform_indices = @transform_4, window_bounds = array<i64: 1, 1, 6, 2>}, {transform_indices = @transform_5, window_bounds = array<i64: 1, 1, 6, 2>}, {transform_indices = @transform_6, window_bounds = array<i64: 1, 1, 6, 2>}]} {
    %c0 = arith.constant 0 : index
    %c0_0 = arith.constant 0 : index
    %c0_1 = arith.constant 0 : index
    %0 = vector.load %arg3[%c0, %c0_0, %c0_1] : memref<1x6x3xf32, #tpu.memory_space<vmem>>, vector<1x6x3xf32>
    %1 = vector.shape_cast %0 : vector<1x6x3xf32> to vector<6x3xf32>
    %c0_2 = arith.constant 0 : index
    %c0_3 = arith.constant 0 : index
    %c0_4 = arith.constant 0 : index
    %2 = vector.load %arg4[%c0_2, %c0_3, %c0_4] : memref<1x3x2xf32, #tpu.memory_space<vmem>>, vector<1x3x2xf32>
    %3 = vector.shape_cast %2 : vector<1x3x2xf32> to vector<3x2xf32>
    %cst = arith.constant dense<0.000000e+00> : vector<6x2xf32>
    %4 = tpu.matmul %1, %3, %cst {dimension_numbers = #tpu.dot_dimension_numbers<[1], [0], [0], [1], [0, 0, 1, 1], [], []>} : vector<6x3xf32>, vector<3x2xf32>, vector<6x2xf32> -> vector<6x2xf32>
    %cst_5 = arith.constant 0.707106769 : f32
    %5 = vector.broadcast %cst_5 : f32 to vector<6x2xf32>
    %6 = arith.mulf %4, %5 : vector<6x2xf32>
    %c0_6 = arith.constant 0 : index
    %c0_7 = arith.constant 0 : index
    %c0_8 = arith.constant 0 : index
    %7 = vector.load %arg5[%c0_6, %c0_7, %c0_8] : memref<1x3x2xf32, #tpu.memory_space<vmem>>, vector<1x3x2xf32>
    %8 = vector.shape_cast %7 : vector<1x3x2xf32> to vector<3x2xf32>
    %cst_9 = arith.constant dense<0.000000e+00> : vector<6x2xf32>
    %9 = tpu.matmul %1, %8, %cst_9 {dimension_numbers = #tpu.dot_dimension_numbers<[1], [0], [0], [1], [0, 0, 1, 1], [], []>} : vector<6x3xf32>, vector<3x2xf32>, vector<6x2xf32> -> vector<6x2xf32>
    %c0_10 = arith.constant 0 : index
    %c0_11 = arith.constant 0 : index
    %c0_12 = arith.constant 0 : index
    %10 = vector.load %arg6[%c0_10, %c0_11, %c0_12] : memref<1x3x2xf32, #tpu.memory_space<vmem>>, vector<1x3x2xf32>
    %11 = vector.shape_cast %10 : vector<1x3x2xf32> to vector<3x2xf32>
    %cst_13 = arith.constant dense<0.000000e+00> : vector<6x2xf32>
    %12 = tpu.matmul %1, %11, %cst_13 {dimension_numbers = #tpu.dot_dimension_numbers<[1], [0], [0], [1], [0, 0, 1, 1], [], []>} : vector<6x3xf32>, vector<3x2xf32>, vector<6x2xf32> -> vector<6x2xf32>
    %c0_14 = arith.constant 0 : index
    %c0_15 = arith.constant 0 : index
    %c0_16 = arith.constant 0 : index
    %c0_17 = arith.constant 0 : index
    %13 = vector.load %arg7[%c0_14, %c0_15, %c0_16, %c0_17] : memref<1x1x6x2xf32, #tpu.memory_space<vmem>>, vector<1x1x6x2xf32>
    %14 = vector.shape_cast %13 : vector<1x1x6x2xf32> to vector<6x2xf32>
    %15 = vector.shape_cast %6 : vector<6x2xf32> to vector<1x1x6x2xf32>
    tpu.vector_store %arg7[%c0_14, %c0_15, %c0_16, %c0_17], %15 {strides = array<i32>} : memref<1x1x6x2xf32, #tpu.memory_space<vmem>>, vector<1x1x6x2xf32>,
    %c0_18 = arith.constant 0 : index
    %c0_19 = arith.constant 0 : index
    %c0_20 = arith.constant 0 : index
    %c0_21 = arith.constant 0 : index
    %16 = vector.load %arg8[%c0_18, %c0_19, %c0_20, %c0_21] : memref<1x1x6x2xf32, #tpu.memory_space<vmem>>, vector<1x1x6x2xf32>
    %17 = vector.shape_cast %16 : vector<1x1x6x2xf32> to vector<6x2xf32>
    %18 = vector.shape_cast %9 : vector<6x2xf32> to vector<1x1x6x2xf32>
    tpu.vector_store %arg8[%c0_18, %c0_19, %c0_20, %c0_21], %18 {strides = array<i32>} : memref<1x1x6x2xf32, #tpu.memory_space<vmem>>, vector<1x1x6x2xf32>,
    %c0_22 = arith.constant 0 : index
    %c0_23 = arith.constant 0 : index
    %c0_24 = arith.constant 0 : index
    %c0_25 = arith.constant 0 : index
    %19 = vector.load %arg9[%c0_22, %c0_23, %c0_24, %c0_25] : memref<1x1x6x2xf32, #tpu.memory_space<vmem>>, vector<1x1x6x2xf32>
    %20 = vector.shape_cast %19 : vector<1x1x6x2xf32> to vector<6x2xf32>
    %21 = vector.shape_cast %12 : vector<6x2xf32> to vector<1x1x6x2xf32>
    tpu.vector_store %arg9[%c0_22, %c0_23, %c0_24, %c0_25], %21 {strides = array<i32>} : memref<1x1x6x2xf32, #tpu.memory_space<vmem>>, vector<1x1x6x2xf32>,
    return
  }
  func.func @transform_0(%arg0: i32, %arg1: i32, %arg2: i32) -> (i32, i32, i32) {
    %c0_i32 = arith.constant 0 : i32
    %c0_i32_0 = arith.constant 0 : i32
    return %arg0, %arg2, %c0_i32 : i32, i32, i32
  }
  func.func @transform_1(%arg0: i32, %arg1: i32, %arg2: i32) -> (i32, i32, i32) {
    %c0_i32 = arith.constant 0 : i32
    %c0_i32_0 = arith.constant 0 : i32
    %c0_i32_1 = arith.constant 0 : i32
    return %arg1, %c0_i32, %c0_i32_0 : i32, i32, i32
  }
  func.func @transform_2(%arg0: i32, %arg1: i32, %arg2: i32) -> (i32, i32, i32) {
    %c0_i32 = arith.constant 0 : i32
    %c0_i32_0 = arith.constant 0 : i32
    %c0_i32_1 = arith.constant 0 : i32
    return %arg1, %c0_i32, %c0_i32_0 : i32, i32, i32
  }
  func.func @transform_3(%arg0: i32, %arg1: i32, %arg2: i32) -> (i32, i32, i32) {
    %c0_i32 = arith.constant 0 : i32
    %c0_i32_0 = arith.constant 0 : i32
    %c0_i32_1 = arith.constant 0 : i32
    return %arg1, %c0_i32, %c0_i32_0 : i32, i32, i32
  }
  func.func @transform_4(%arg0: i32, %arg1: i32, %arg2: i32) -> (i32, i32, i32, i32) {
    %c0_i32 = arith.constant 0 : i32
    %c0_i32_0 = arith.constant 0 : i32
    return %arg0, %arg1, %arg2, %c0_i32 : i32, i32, i32, i32
  }
  func.func @transform_5(%arg0: i32, %arg1: i32, %arg2: i32) -> (i32, i32, i32, i32) {
    %c0_i32 = arith.constant 0 : i32
    %c0_i32_0 = arith.constant 0 : i32
    return %arg0, %arg1, %arg2, %c0_i32 : i32, i32, i32, i32
  }
  func.func @transform_6(%arg0: i32, %arg1: i32, %arg2: i32) -> (i32, i32, i32, i32) {
    %c0_i32 = arith.constant 0 : i32
    %c0_i32_0 = arith.constant 0 : i32
    return %arg0, %arg1, %arg2, %c0_i32 : i32, i32, i32, i32
  }
}

</mosaic_0001>

<llo_original>
// kernel: tpu_custom_call.1
$region0: #{tpu_custom_call.1}
  #allocation0 [shape = 'u32[]', space=smem, size = 0x4, offset = 0x4, fixed_abs, tag = 'smem constant byte address 0x4 - core index']
  #allocation1 [shape = 'u32[144,128]{1,0:T(1,128)}', space=vmem, size = 0x12000, scoped, tag = 'internal scratch']
  %s0 = inlined_call_operand.vmem [shape: f32[2,6,3], index: 0, kind: input, shape index: {}]
  %s1 = inlined_call_operand.vmem [shape: f32[2,3,2], index: 1, kind: input, shape index: {}]
  %s2 = inlined_call_operand.vmem [shape: f32[2,3,2], index: 2, kind: input, shape index: {}]
  %s3 = inlined_call_operand.vmem [shape: f32[2,3,2], index: 3, kind: input, shape index: {}]
  %s4 = inlined_call_operand.vmem [shape: f32[2,2,6,2], index: 4, kind: output, shape index: {0}]
  %s5 = inlined_call_operand.vmem [shape: f32[2,2,6,2], index: 5, kind: output, shape index: {1}]
  %s6 = inlined_call_operand.vmem [shape: f32[2,2,6,2], index: 6, kind: output, shape index: {2}]
  %7 = xla_tuple %s4, %s5, %s6
  %s8 = sld [smem:[#allocation0]]
  $region65: #{tpu_custom_call.1} parent=0
    _
  %s10 = ssub.s32 1, %s8
  %s11 = scalar_select 0, %s10, %s8
  loop: start=0, step=1, limit=6
  $region2: #{tpu_custom_call.1} parent=0 // loop_pre_header
    _
  $region3: #{tpu_custom_call.1} parent=0 // loop_header
    %s13 = sphi 0, %s17
    %p14 = scmp.ge.s32.totalorder %s13, 6
    %s20 = sphi 0, %s39
    %s21 = sphi 0, %s35
    %s22 = sphi 0, %s31
    %s23 = sphi 0, %s20
    %s24 = sphi 0, %s21
    %s25 = sphi 0, %s22
    %s26 = sphi 0, %s23
    %s27 = sphi 0, %s24
    %s28 = sphi 0, %s25
    %s44 = sphi 0, %s46
    %s47 = sphi 0, %s44
    %s48 = sphi 0, %s47
    %s64 = sphi 0, %s48
    %s70 = sphi 0, %s72
    %s73 = sphi 0, %s70
    %s74 = sphi 0, %s73
    %s90 = sphi 0, %s74
    %s96 = sphi 0, %s98
    %s99 = sphi 0, %s96
    %s100 = sphi 0, %s99
    %s116 = sphi 0, %s100
    %s122 = sphi 0, %s124
    %s125 = sphi 0, %s122
    %s126 = sphi 0, %s125
    %s142 = sphi 0, %s126
    %s152 = sphi 0, %s154
    %s155 = sphi 0, %s152
    %s156 = sphi 0, %s155
    %s172 = sphi 0, %s156
    %s182 = sphi 0, %s184
    %s185 = sphi 0, %s182
    %s186 = sphi 0, %s185
    %s202 = sphi 0, %s186
    %s212 = sphi 0, %s214
    %s215 = sphi 0, %s212
    %s216 = sphi 0, %s215
    %s232 = sphi 0, %s216
  $region4: #{tpu_custom_call.1} parent=0 // loop_header_branch
    %16 = sbr.rel (%p14) target = $region8
  $region5: #{tpu_custom_call.1} parent=0 // loop_body
    %s18 = ssub.s32 %s13, 1
    %s19 = ssub.s32 %s13, 2
    %s29 = sadd.s32 1, %s22
    %p30 = scmp.ge.s32.totalorder %s29, 1
    %s31 = scalar_select %p30, 0, %s29
    %s32 = sadd.s32 1, %s21
    %s33 = scalar_select %p30, %s32, %s21
    %p34 = scmp.ge.s32.totalorder %s33, 2
    %s35 = scalar_select %p34, 0, %s33
    %s36 = sadd.s32 1, %s20
    %s37 = scalar_select %p34, %s36, %s20
    %p38 = scmp.ge.s32.totalorder %s37, 2
    %s39 = scalar_select %p38, 0, %s37
    %s40 = ssub.s32 %s20, %s39
    %s41 = ssub.s32 %s22, %s31
    %s42 = sor.u32 %s40, %s41
    %p43 = scmp.eq.s32.totalorder %s42, 0
    %s45 = sadd.s32 %s44, 1
    %s46 = scalar_select %p43, %s44, %s45
    %p49 = pneg %p43
    %p50 = scmp.eq.s32.totalorder %s13, 3
    %p51 = por %p49, %p50
    %p52 = scmp.ne.s32.totalorder %s44, %s47
    %p53 = scmp.eq.s32.totalorder %s13, 0
    %p54 = por %p52, %p53
    %p55 = scmp.ne.s32.totalorder %s44, %s47
    %p56 = scmp.eq.s32.totalorder %s18, 3
    %p57 = por %p55, %p56
    %p58 = scmp.ne.s32.totalorder %s47, %s48
    %p59 = scmp.eq.s32.totalorder %s18, 0
    %p60 = por %p58, %p59
    %p61 = scmp.ne.s32.totalorder %s47, %s48
    %p62 = scmp.eq.s32.totalorder %s19, 3
    %p63 = por %p61, %p62
    %p65 = scmp.ne.s32.totalorder %s48, %s64
    %p66 = scmp.eq.s32.totalorder %s19, 0
    %p67 = por %p65, %p66
    %s68 = ssub.s32 %s21, %s35
    %p69 = scmp.eq.s32.totalorder %s68, 0
    %s71 = sadd.s32 %s70, 1
    %s72 = scalar_select %p69, %s70, %s71
    %p75 = pneg %p69
    %p76 = scmp.eq.s32.totalorder %s13, 3
    %p77 = por %p75, %p76
    %p78 = scmp.ne.s32.totalorder %s70, %s73
    %p79 = scmp.eq.s32.totalorder %s13, 0
    %p80 = por %p78, %p79
    %p81 = scmp.ne.s32.totalorder %s70, %s73
    %p82 = scmp.eq.s32.totalorder %s18, 3
    %p83 = por %p81, %p82
    %p84 = scmp.ne.s32.totalorder %s73, %s74
    %p85 = scmp.eq.s32.totalorder %s18, 0
    %p86 = por %p84, %p85
    %p87 = scmp.ne.s32.totalorder %s73, %s74
    %p88 = scmp.eq.s32.totalorder %s19, 3
    %p89 = por %p87, %p88
    %p91 = scmp.ne.s32.totalorder %s74, %s90
    %p92 = scmp.eq.s32.totalorder %s19, 0
    %p93 = por %p91, %p92
    %s94 = ssub.s32 %s21, %s35
    %p95 = scmp.eq.s32.totalorder %s94, 0
    %s97 = sadd.s32 %s96, 1
    %s98 = scalar_select %p95, %s96, %s97
    %p101 = pneg %p95
    %p102 = scmp.eq.s32.totalorder %s13, 3
    %p103 = por %p101, %p102
    %p104 = scmp.ne.s32.totalorder %s96, %s99
    %p105 = scmp.eq.s32.totalorder %s13, 0
    %p106 = por %p104, %p105
    %p107 = scmp.ne.s32.totalorder %s96, %s99
    %p108 = scmp.eq.s32.totalorder %s18, 3
    %p109 = por %p107, %p108
    %p110 = scmp.ne.s32.totalorder %s99, %s100
    %p111 = scmp.eq.s32.totalorder %s18, 0
    %p112 = por %p110, %p111
    %p113 = scmp.ne.s32.totalorder %s99, %s100
    %p114 = scmp.eq.s32.totalorder %s19, 3
    %p115 = por %p113, %p114
    %p117 = scmp.ne.s32.totalorder %s100, %s116
    %p118 = scmp.eq.s32.totalorder %s19, 0
    %p119 = por %p117, %p118
    %s120 = ssub.s32 %s21, %s35
    %p121 = scmp.eq.s32.totalorder %s120, 0
    %s123 = sadd.s32 %s122, 1
    %s124 = scalar_select %p121, %s122, %s123
    %p127 = pneg %p121
    %p128 = scmp.eq.s32.totalorder %s13, 3
    %p129 = por %p127, %p128
    %p130 = scmp.ne.s32.totalorder %s122, %s125
    %p131 = scmp.eq.s32.totalorder %s13, 0
    %p132 = por %p130, %p131
    %p133 = scmp.ne.s32.totalorder %s122, %s125
    %p134 = scmp.eq.s32.totalorder %s18, 3
    %p135 = por %p133, %p134
    %p136 = scmp.ne.s32.totalorder %s125, %s126
    %p137 = scmp.eq.s32.totalorder %s18, 0
    %p138 = por %p136, %p137
    %p139 = scmp.ne.s32.totalorder %s125, %s126
    %p140 = scmp.eq.s32.totalorder %s19, 3
    %p141 = por %p139, %p140
    %p143 = scmp.ne.s32.totalorder %s126, %s142
    %p144 = scmp.eq.s32.totalorder %s19, 0
    %p145 = por %p143, %p144
    %s146 = ssub.s32 %s20, %s39
    %s147 = ssub.s32 %s21, %s35
    %s148 = sor.u32 %s146, %s147
    %s149 = ssub.s32 %s22, %s31
    %s150 = sor.u32 %s148, %s149
    %p151 = scmp.eq.s32.totalorder %s150, 0
    %s153 = sadd.s32 %s152, 1
    %s154 = scalar_select %p151, %s152, %s153
    %p157 = pneg %p151
    %p158 = scmp.eq.s32.totalorder %s13, 3
    %p159 = por %p157, %p158
    %p160 = scmp.ne.s32.totalorder %s152, %s155
    %p161 = scmp.eq.s32.totalorder %s13, 0
    %p162 = por %p160, %p161
    %p163 = scmp.ne.s32.totalorder %s152, %s155
    %p164 = scmp.eq.s32.totalorder %s18, 3
    %p165 = por %p163, %p164
    %p166 = scmp.ne.s32.totalorder %s155, %s156
    %p167 = scmp.eq.s32.totalorder %s18, 0
    %p168 = por %p166, %p167
    %p169 = scmp.ne.s32.totalorder %s155, %s156
    %p170 = scmp.eq.s32.totalorder %s19, 3
    %p171 = por %p169, %p170
    %p173 = scmp.ne.s32.totalorder %s156, %s172
    %p174 = scmp.eq.s32.totalorder %s19, 0
    %p175 = por %p173, %p174
    %s176 = ssub.s32 %s20, %s39
    %s177 = ssub.s32 %s21, %s35
    %s178 = sor.u32 %s176, %s177
    %s179 = ssub.s32 %s22, %s31
    %s180 = sor.u32 %s178, %s179
    %p181 = scmp.eq.s32.totalorder %s180, 0
    %s183 = sadd.s32 %s182, 1
    %s184 = scalar_select %p181, %s182, %s183
    %p187 = pneg %p181
    %p188 = scmp.eq.s32.totalorder %s13, 3
    %p189 = por %p187, %p188
    %p190 = scmp.ne.s32.totalorder %s182, %s185
    %p191 = scmp.eq.s32.totalorder %s13, 0
    %p192 = por %p190, %p191
    %p193 = scmp.ne.s32.totalorder %s182, %s185
    %p194 = scmp.eq.s32.totalorder %s18, 3
    %p195 = por %p193, %p194
    %p196 = scmp.ne.s32.totalorder %s185, %s186
    %p197 = scmp.eq.s32.totalorder %s18, 0
    %p198 = por %p196, %p197
    %p199 = scmp.ne.s32.totalorder %s185, %s186
    %p200 = scmp.eq.s32.totalorder %s19, 3
    %p201 = por %p199, %p200
    %p203 = scmp.ne.s32.totalorder %s186, %s202
    %p204 = scmp.eq.s32.totalorder %s19, 0
    %p205 = por %p203, %p204
    %s206 = ssub.s32 %s20, %s39
    %s207 = ssub.s32 %s21, %s35
    %s208 = sor.u32 %s206, %s207
    %s209 = ssub.s32 %s22, %s31
    %s210 = sor.u32 %s208, %s209
    %p211 = scmp.eq.s32.totalorder %s210, 0
    %s213 = sadd.s32 %s212, 1
    %s214 = scalar_select %p211, %s212, %s213
    %p217 = pneg %p211
    %p218 = scmp.eq.s32.totalorder %s13, 3
    %p219 = por %p217, %p218
    %p220 = scmp.ne.s32.totalorder %s212, %s215
    %p221 = scmp.eq.s32.totalorder %s13, 0
    %p222 = por %p220, %p221
    %p223 = scmp.ne.s32.totalorder %s212, %s215
    %p224 = scmp.eq.s32.totalorder %s18, 3
    %p225 = por %p223, %p224
    %p226 = scmp.ne.s32.totalorder %s215, %s216
    %p227 = scmp.eq.s32.totalorder %s18, 0
    %p228 = por %p226, %p227
    %p229 = scmp.ne.s32.totalorder %s215, %s216
    %p230 = scmp.eq.s32.totalorder %s19, 3
    %p231 = por %p229, %p230
    %p233 = scmp.ne.s32.totalorder %s216, %s232
    %p234 = scmp.eq.s32.totalorder %s19, 0
    %p235 = por %p233, %p234
    %p236 = scmp.le.s32.totalorder 1, %s13
    %p237 = scmp.lt.s32.totalorder %s13, 5
    %p238 = pnand %p236, %p237
    %p239 = pneg %p238
    // Predicated region
    $region9: #{tpu_custom_call.1} parent=5 // pred_check
      _
    $region10: #{tpu_custom_call.1} parent=5 // pred_check_branch
      %241 = sbr.rel (%p238) target = $region12
    $region11: #{tpu_custom_call.1} parent=5 // pred_region
      %s242 = ssub.s32 %s13, 1
    $region12: #{tpu_custom_call.1} parent=5 // pred_fallthru
      _
    %p243 = scmp.lt.s32.totalorder %s13, 4
    // Predicated region
    $region13: #{tpu_custom_call.1} parent=5 // pred_check
      %p244 = pneg %p243
    $region14: #{tpu_custom_call.1} parent=5 // pred_check_branch
      %246 = sbr.rel (%p244) target = $region16
    $region15: #{tpu_custom_call.1} parent=5 // pred_region
      // Predicated region
      $region17: #{tpu_custom_call.1} parent=15 // pred_check
        %p247 = pneg %p54
      $region18: #{tpu_custom_call.1} parent=15 // pred_check_branch
        %249 = sbr.rel (%p247) target = $region20
      $region19: #{tpu_custom_call.1} parent=15 // pred_region
        %p250 = scmp.lt.s32.totalorder %s20, 1
        %s251 = scalar_select %p250, %s20, 1
        %p252 = scmp.lt.s32.totalorder %s22, 0
        %s253 = scalar_select %p252, %s22, 0
        %s254 = sadd.s32 %s253, %s251
        %s255 = smul.addr %s254, 8
        %s256 = scalar_lea.vmem %s0, %s255
      $region20: #{tpu_custom_call.1} parent=15 // pred_fallthru
        _
      // Predicated region
      $region21: #{tpu_custom_call.1} parent=15 // pred_check
        %p257 = pneg %p80
      $region22: #{tpu_custom_call.1} parent=15 // pred_check_branch
        %259 = sbr.rel (%p257) target = $region24
      $region23: #{tpu_custom_call.1} parent=15 // pred_region
        %p260 = scmp.lt.s32.totalorder %s21, 1
        %s261 = scalar_select %p260, %s21, 1
        %s262 = smul.addr %s261, 4
        %s263 = scalar_lea.vmem %s1, %s262
      $region24: #{tpu_custom_call.1} parent=15 // pred_fallthru
        _
      // Predicated region
      $region25: #{tpu_custom_call.1} parent=15 // pred_check
        %p264 = pneg %p106
      $region26: #{tpu_custom_call.1} parent=15 // pred_check_branch
        %266 = sbr.rel (%p264) target = $region28
      $region27: #{tpu_custom_call.1} parent=15 // pred_region
        %p267 = scmp.lt.s32.totalorder %s21, 1
        %s268 = scalar_select %p267, %s21, 1
        %s269 = smul.addr %s268, 4
        %s270 = scalar_lea.vmem %s2, %s269
      $region28: #{tpu_custom_call.1} parent=15 // pred_fallthru
        _
      // Predicated region
      $region29: #{tpu_custom_call.1} parent=15 // pred_check
        %p271 = pneg %p132
      $region30: #{tpu_custom_call.1} parent=15 // pred_check_branch
        %273 = sbr.rel (%p271) target = $region32
      $region31: #{tpu_custom_call.1} parent=15 // pred_region
        %p274 = scmp.lt.s32.totalorder %s21, 1
        %s275 = scalar_select %p274, %s21, 1
        %s276 = smul.addr %s275, 4
        %s277 = scalar_lea.vmem %s3, %s276
      $region32: #{tpu_custom_call.1} parent=15 // pred_fallthru
        _
    $region16: #{tpu_custom_call.1} parent=5 // pred_fallthru
      _
    %p278 = scmp.le.s32.totalorder 1, %s13
    %p279 = scmp.lt.s32.totalorder %s13, 5
    %p280 = pnand %p278, %p279
    %p281 = pneg %p280
    // Predicated region
    $region33: #{tpu_custom_call.1} parent=5 // pred_check
      _
    $region34: #{tpu_custom_call.1} parent=5 // pred_check_branch
      %283 = sbr.rel (%p280) target = $region36
    $region35: #{tpu_custom_call.1} parent=5 // pred_region
      %s284 = ssub.s32 %s13, 1
      %p285 = scmp.lt.s32.totalorder %s23, 1
      %s286 = scalar_select %p285, %s23, 1
      %p287 = scmp.lt.s32.totalorder %s25, 0
      %s288 = scalar_select %p287, %s25, 0
      %s289 = sadd.s32 %s288, %s286
      %s290 = smul.addr %s289, 8
      %s291 = scalar_lea.vmem %s0, %s290
      %p292 = pneg %p60
      %p293 = pneg %p57
      %p294 = scmp.lt.s32.totalorder %s24, 1
      %s295 = scalar_select %p294, %s24, 1
      %s296 = smul.addr %s295, 4
      %s297 = scalar_lea.vmem %s1, %s296
      %p298 = pneg %p86
      %p299 = pneg %p83
      %p300 = scmp.lt.s32.totalorder %s24, 1
      %s301 = scalar_select %p300, %s24, 1
      %s302 = smul.addr %s301, 4
      %s303 = scalar_lea.vmem %s2, %s302
      %p304 = pneg %p112
      %p305 = pneg %p109
      %p306 = scmp.lt.s32.totalorder %s24, 1
      %s307 = scalar_select %p306, %s24, 1
      %s308 = smul.addr %s307, 4
      %s309 = scalar_lea.vmem %s3, %s308
      %p310 = pneg %p138
      %p311 = pneg %p135
      %p312 = pneg %p168
      %p313 = pneg %p165
      %p314 = scmp.lt.s32.totalorder %s23, 1
      %s315 = scalar_select %p314, %s23, 1
      %p316 = scmp.lt.s32.totalorder %s24, 1
      %s317 = scalar_select %p316, %s24, 1
      %p318 = scmp.lt.s32.totalorder %s25, 0
      %s319 = scalar_select %p318, %s25, 0
      %s320 = sadd.s32 %s319, %s317
      %s321 = smul.addr %s315, 2
      %s322 = sadd.s32 %s320, %s321
      %s323 = smul.addr %s322, 8
      %s324 = scalar_lea.vmem %s4, %s323
      %p325 = pneg %p198
      %p326 = pneg %p195
      %p327 = scmp.lt.s32.totalorder %s23, 1
      %s328 = scalar_select %p327, %s23, 1
      %p329 = scmp.lt.s32.totalorder %s24, 1
      %s330 = scalar_select %p329, %s24, 1
      %p331 = scmp.lt.s32.totalorder %s25, 0
      %s332 = scalar_select %p331, %s25, 0
      %s333 = sadd.s32 %s332, %s330
      %s334 = smul.addr %s328, 2
      %s335 = sadd.s32 %s333, %s334
      %s336 = smul.addr %s335, 8
      %s337 = scalar_lea.vmem %s5, %s336
      %p338 = pneg %p228
      %p339 = pneg %p225
      %p340 = scmp.lt.s32.totalorder %s23, 1
      %s341 = scalar_select %p340, %s23, 1
      %p342 = scmp.lt.s32.totalorder %s24, 1
      %s343 = scalar_select %p342, %s24, 1
      %p344 = scmp.lt.s32.totalorder %s25, 0
      %s345 = scalar_select %p344, %s25, 0
      %s346 = sadd.s32 %s345, %s343
      %s347 = smul.addr %s341, 2
      %s348 = sadd.s32 %s346, %s347
      %s349 = smul.addr %s348, 8
      %s350 = scalar_lea.vmem %s6, %s349
      %p351 = scmp.lt.s32.totalorder %s23, 1
      %s352 = scalar_select %p351, %s23, 1
      %p353 = scmp.lt.s32.totalorder %s25, 0
      %s354 = scalar_select %p353, %s25, 0
      %s355 = sadd.s32 %s354, %s352
      %s356 = smul.addr %s355, 8
      %s357 = scalar_lea.vmem %s0, %s356
      %p358 = scmp.lt.s32.totalorder %s24, 1
      %s359 = scalar_select %p358, %s24, 1
      %s360 = smul.addr %s359, 4
      %s361 = scalar_lea.vmem %s1, %s360
      %p362 = scmp.lt.s32.totalorder %s24, 1
      %s363 = scalar_select %p362, %s24, 1
      %s364 = smul.addr %s363, 4
      %s365 = scalar_lea.vmem %s2, %s364
      %p366 = scmp.lt.s32.totalorder %s24, 1
      %s367 = scalar_select %p366, %s24, 1
      %s368 = smul.addr %s367, 4
      %s369 = scalar_lea.vmem %s3, %s368
      %p370 = scmp.lt.s32.totalorder %s23, 1
      %s371 = scalar_select %p370, %s23, 1
      %p372 = scmp.lt.s32.totalorder %s24, 1
      %s373 = scalar_select %p372, %s24, 1
      %p374 = scmp.lt.s32.totalorder %s25, 0
      %s375 = scalar_select %p374, %s25, 0
      %s376 = sadd.s32 %s375, %s373
      %s377 = smul.addr %s371, 2
      %s378 = sadd.s32 %s376, %s377
      %s379 = smul.addr %s378, 8
      %s380 = scalar_lea.vmem %s4, %s379
      %p381 = scmp.lt.s32.totalorder %s23, 1
      %s382 = scalar_select %p381, %s23, 1
      %p383 = scmp.lt.s32.totalorder %s24, 1
      %s384 = scalar_select %p383, %s24, 1
      %p385 = scmp.lt.s32.totalorder %s25, 0
      %s386 = scalar_select %p385, %s25, 0
      %s387 = sadd.s32 %s386, %s384
      %s388 = smul.addr %s382, 2
      %s389 = sadd.s32 %s387, %s388
      %s390 = smul.addr %s389, 8
      %s391 = scalar_lea.vmem %s5, %s390
      %p392 = scmp.lt.s32.totalorder %s23, 1
      %s393 = scalar_select %p392, %s23, 1
      %p394 = scmp.lt.s32.totalorder %s24, 1
      %s395 = scalar_select %p394, %s24, 1
      %p396 = scmp.lt.s32.totalorder %s25, 0
      %s397 = scalar_select %p396, %s25, 0
      %s398 = sadd.s32 %s397, %s395
      %s399 = smul.addr %s393, 2
      %s400 = sadd.s32 %s398, %s399
      %s401 = smul.addr %s400, 8
      %s402 = scalar_lea.vmem %s6, %s401
      %v403 = vld [vmem:[%s357] sm:$0x3f]
      %v404 = vld [vmem:[%s361] sm:$0x7]
      %vm405 = vcmask 23552
      %v407 = vsel %vm405, %v403, 0
      %vm409 = vcmask 1042432
      %v411 = vsel %vm409, %v404, 0
      %413 = vmatprep.subr.mxu0 0.0
      %414 = vmatpush1.msra.mxu0 0.0
      %415 = vmatprep.subr.mxu0 0.0
      %416 = vmatpush1.msra.mxu0 0.0
      %417 = vmatprep.subr.mxu0 0.0
      %418 = vmatpush1.msra.mxu0 0.0
      %419 = vmatprep.subr.mxu0 0.0
      %420 = vmatpush1.msra.mxu0 0.0
      %421 = vmatprep.subr.mxu0 0.0
      %422 = vmatpush1.msra.mxu0 0.0
      %423 = vmatprep.subr.mxu0 0.0
      %424 = vmatpush1.msra.mxu0 0.0
      %425 = vmatprep.subr.mxu0 0.0
      %426 = vmatpush1.msra.mxu0 0.0
      %427 = vmatprep.subr.mxu0 0.0
      %428 = vmatpush1.msra.mxu0 0.0
      %429 = vmatprep.subr.mxu0 0.0
      %430 = vmatpush1.msra.mxu0 0.0
      %431 = vmatprep.subr.mxu0 0.0
      %432 = vmatpush1.msra.mxu0 0.0
      %433 = vmatprep.subr.mxu0 0.0
      %434 = vmatpush1.msra.mxu0 0.0
      %435 = vmatprep.subr.mxu0 0.0
      %436 = vmatpush1.msra.mxu0 0.0
      %437 = vmatprep.subr.mxu0 0.0
      %438 = vmatpush1.msra.mxu0 0.0
      %439 = vmatprep.subr.mxu0 0.0
      %440 = vmatpush1.msra.mxu0 0.0
      %441 = vmatprep.subr.mxu0 0.0
      %442 = vmatpush1.msra.mxu0 0.0
      %443 = vmatprep.subr.mxu0 0.0
      %444 = vmatpush1.msra.mxu0 %v411
      %445 = vmatprep.subr.mxu0 0.0
      %446 = vmatpush2.msra.mxu0 0.0
      %447 = vmatprep.subr.mxu0 0.0
      %448 = vmatpush2.msra.mxu0 0.0
      %449 = vmatprep.subr.mxu0 0.0
      %450 = vmatpush2.msra.mxu0 0.0
      %451 = vmatprep.subr.mxu0 0.0
      %452 = vmatpush2.msra.mxu0 0.0
      %453 = vmatprep.subr.mxu0 0.0
      %454 = vmatpush2.msra.mxu0 0.0
      %455 = vmatprep.subr.mxu0 0.0
      %456 = vmatpush2.msra.mxu0 0.0
      %457 = vmatprep.subr.mxu0 0.0
      %458 = vmatpush2.msra.mxu0 0.0
      %459 = vmatprep.subr.mxu0 0.0
      %460 = vmatpush2.msra.mxu0 0.0
      %461 = vmatprep.subr.mxu0 0.0
      %462 = vmatpush2.msra.mxu0 0.0
      %463 = vmatprep.subr.mxu0 0.0
      %464 = vmatpush2.msra.mxu0 0.0
      %465 = vmatprep.subr.mxu0 0.0
      %466 = vmatpush2.msra.mxu0 0.0
      %467 = vmatprep.subr.mxu0 0.0
      %468 = vmatpush2.msra.mxu0 0.0
      %469 = vmatprep.subr.mxu0 0.0
      %470 = vmatpush2.msra.mxu0 0.0
      %471 = vmatprep.subr.mxu0 0.0
      %472 = vmatpush2.msra.mxu0 0.0
      %473 = vmatprep.subr.mxu0 0.0
      %474 = vmatpush2.msra.mxu0 0.0
      %475 = vmatprep.subr.mxu0 0.0
      %476 = vmatpush2.msra.mxu0 0.0
      %477 = vmatprep.mubr.f32.mxu0 0.0
      %478 = vmatmul.mubr.f32.gmra.mxu0 %v407
      %v479 = vpop.f32.mrf.mxu0
      %v480 = vadd.f32 0.0, %v479
      %v481 = vpop.f32.mrf.mxu0
      %482 = vdwg.mxu0
      %v483 = vmul.f32 %v480, 0.70710677
      %v484 = vld [vmem:[%s365] sm:$0x7]
      %v486 = vsel %vm409, %v484, 0
      %488 = vmatprep.subr.mxu0 0.0
      %489 = vmatpush1.msra.mxu0 0.0
      %490 = vmatprep.subr.mxu0 0.0
      %491 = vmatpush1.msra.mxu0 0.0
      %492 = vmatprep.subr.mxu0 0.0
      %493 = vmatpush1.msra.mxu0 0.0
      %494 = vmatprep.subr.mxu0 0.0
      %495 = vmatpush1.msra.mxu0 0.0
      %496 = vmatprep.subr.mxu0 0.0
      %497 = vmatpush1.msra.mxu0 0.0
      %498 = vmatprep.subr.mxu0 0.0
      %499 = vmatpush1.msra.mxu0 0.0
      %500 = vmatprep.subr.mxu0 0.0
      %501 = vmatpush1.msra.mxu0 0.0
      %502 = vmatprep.subr.mxu0 0.0
      %503 = vmatpush1.msra.mxu0 0.0
      %504 = vmatprep.subr.mxu0 0.0
      %505 = vmatpush1.msra.mxu0 0.0
      %506 = vmatprep.subr.mxu0 0.0
      %507 = vmatpush1.msra.mxu0 0.0
      %508 = vmatprep.subr.mxu0 0.0
      %509 = vmatpush1.msra.mxu0 0.0
      %510 = vmatprep.subr.mxu0 0.0
      %511 = vmatpush1.msra.mxu0 0.0
      %512 = vmatprep.subr.mxu0 0.0
      %513 = vmatpush1.msra.mxu0 0.0
      %514 = vmatprep.subr.mxu0 0.0
      %515 = vmatpush1.msra.mxu0 0.0
      %516 = vmatprep.subr.mxu0 0.0
      %517 = vmatpush1.msra.mxu0 0.0
      %518 = vmatprep.subr.mxu0 0.0
      %519 = vmatpush1.msra.mxu0 %v486
      %520 = vmatprep.subr.mxu0 0.0
      %521 = vmatpush2.msra.mxu0 0.0
      %522 = vmatprep.subr.mxu0 0.0
      %523 = vmatpush2.msra.mxu0 0.0
      %524 = vmatprep.subr.mxu0 0.0
      %525 = vmatpush2.msra.mxu0 0.0
      %526 = vmatprep.subr.mxu0 0.0
      %527 = vmatpush2.msra.mxu0 0.0
      %528 = vmatprep.subr.mxu0 0.0
      %529 = vmatpush2.msra.mxu0 0.0
      %530 = vmatprep.subr.mxu0 0.0
      %531 = vmatpush2.msra.mxu0 0.0
      %532 = vmatprep.subr.mxu0 0.0
      %533 = vmatpush2.msra.mxu0 0.0
      %534 = vmatprep.subr.mxu0 0.0
      %535 = vmatpush2.msra.mxu0 0.0
      %536 = vmatprep.subr.mxu0 0.0
      %537 = vmatpush2.msra.mxu0 0.0
      %538 = vmatprep.subr.mxu0 0.0
      %539 = vmatpush2.msra.mxu0 0.0
      %540 = vmatprep.subr.mxu0 0.0
      %541 = vmatpush2.msra.mxu0 0.0
      %542 = vmatprep.subr.mxu0 0.0
      %543 = vmatpush2.msra.mxu0 0.0
      %544 = vmatprep.subr.mxu0 0.0
      %545 = vmatpush2.msra.mxu0 0.0
      %546 = vmatprep.subr.mxu0 0.0
      %547 = vmatpush2.msra.mxu0 0.0
      %548 = vmatprep.subr.mxu0 0.0
      %549 = vmatpush2.msra.mxu0 0.0
      %550 = vmatprep.subr.mxu0 0.0
      %551 = vmatpush2.msra.mxu0 0.0
      %552 = vmatprep.mubr.f32.mxu0 0.0
      %553 = vmatmul.mubr.f32.gmra.mxu0 %v407
      %v554 = vpop.f32.mrf.mxu0
      %v555 = vadd.f32 0.0, %v554
      %v556 = vpop.f32.mrf.mxu0
      %557 = vdwg.mxu0
      %v558 = vld [vmem:[%s369] sm:$0x7]
      %v560 = vsel %vm409, %v558, 0
      %562 = vmatprep.subr.mxu0 0.0
      %563 = vmatpush1.msra.mxu0 0.0
      %564 = vmatprep.subr.mxu0 0.0
      %565 = vmatpush1.msra.mxu0 0.0
      %566 = vmatprep.subr.mxu0 0.0
      %567 = vmatpush1.msra.mxu0 0.0
      %568 = vmatprep.subr.mxu0 0.0
      %569 = vmatpush1.msra.mxu0 0.0
      %570 = vmatprep.subr.mxu0 0.0
      %571 = vmatpush1.msra.mxu0 0.0
      %572 = vmatprep.subr.mxu0 0.0
      %573 = vmatpush1.msra.mxu0 0.0
      %574 = vmatprep.subr.mxu0 0.0
      %575 = vmatpush1.msra.mxu0 0.0
      %576 = vmatprep.subr.mxu0 0.0
      %577 = vmatpush1.msra.mxu0 0.0
      %578 = vmatprep.subr.mxu0 0.0
      %579 = vmatpush1.msra.mxu0 0.0
      %580 = vmatprep.subr.mxu0 0.0
      %581 = vmatpush1.msra.mxu0 0.0
      %582 = vmatprep.subr.mxu0 0.0
      %583 = vmatpush1.msra.mxu0 0.0
      %584 = vmatprep.subr.mxu0 0.0
      %585 = vmatpush1.msra.mxu0 0.0
      %586 = vmatprep.subr.mxu0 0.0
      %587 = vmatpush1.msra.mxu0 0.0
      %588 = vmatprep.subr.mxu0 0.0
      %589 = vmatpush1.msra.mxu0 0.0
      %590 = vmatprep.subr.mxu0 0.0
      %591 = vmatpush1.msra.mxu0 0.0
      %592 = vmatprep.subr.mxu0 0.0
      %593 = vmatpush1.msra.mxu0 %v560
      %594 = vmatprep.subr.mxu0 0.0
      %595 = vmatpush2.msra.mxu0 0.0
      %596 = vmatprep.subr.mxu0 0.0
      %597 = vmatpush2.msra.mxu0 0.0
      %598 = vmatprep.subr.mxu0 0.0
      %599 = vmatpush2.msra.mxu0 0.0
      %600 = vmatprep.subr.mxu0 0.0
      %601 = vmatpush2.msra.mxu0 0.0
      %602 = vmatprep.subr.mxu0 0.0
      %603 = vmatpush2.msra.mxu0 0.0
      %604 = vmatprep.subr.mxu0 0.0
      %605 = vmatpush2.msra.mxu0 0.0
      %606 = vmatprep.subr.mxu0 0.0
      %607 = vmatpush2.msra.mxu0 0.0
      %608 = vmatprep.subr.mxu0 0.0
      %609 = vmatpush2.msra.mxu0 0.0
      %610 = vmatprep.subr.mxu0 0.0
      %611 = vmatpush2.msra.mxu0 0.0
      %612 = vmatprep.subr.mxu0 0.0
      %613 = vmatpush2.msra.mxu0 0.0
      %614 = vmatprep.subr.mxu0 0.0
      %615 = vmatpush2.msra.mxu0 0.0
      %616 = vmatprep.subr.mxu0 0.0
      %617 = vmatpush2.msra.mxu0 0.0
      %618 = vmatprep.subr.mxu0 0.0
      %619 = vmatpush2.msra.mxu0 0.0
      %620 = vmatprep.subr.mxu0 0.0
      %621 = vmatpush2.msra.mxu0 0.0
      %622 = vmatprep.subr.mxu0 0.0
      %623 = vmatpush2.msra.mxu0 0.0
      %624 = vmatprep.subr.mxu0 0.0
      %625 = vmatpush2.msra.mxu0 0.0
      %626 = vmatprep.mubr.f32.mxu0 0.0
      %627 = vmatmul.mubr.f32.gmra.mxu0 %v407
      %v628 = vpop.f32.mrf.mxu0
      %v629 = vadd.f32 0.0, %v628
      %v630 = vpop.f32.mrf.mxu0
      %631 = vdwg.mxu0
      %vm632 = vcmask 13312
      %633 = vst.msk [vmem:[%s380] sm:$0x3f] %vm632, %v483
      %634 = vst.msk [vmem:[%s391] sm:$0x3f] %vm632, %v555
      %635 = vst.msk [vmem:[%s402] sm:$0x3f] %vm632, %v629
      %p636 = scmp.lt.s32.totalorder %s23, 1
      %s637 = scalar_select %p636, %s23, 1
      %p638 = scmp.lt.s32.totalorder %s24, 1
      %s639 = scalar_select %p638, %s24, 1
      %p640 = scmp.lt.s32.totalorder %s25, 0
      %s641 = scalar_select %p640, %s25, 0
      %s642 = sadd.s32 %s641, %s639
      %s643 = smul.addr %s637, 2
      %s644 = sadd.s32 %s642, %s643
      %s645 = smul.addr %s644, 8
      %s646 = scalar_lea.vmem %s4, %s645
      %p647 = scmp.lt.s32.totalorder %s23, 1
      %s648 = scalar_select %p647, %s23, 1
      %p649 = scmp.lt.s32.totalorder %s24, 1
      %s650 = scalar_select %p649, %s24, 1
      %p651 = scmp.lt.s32.totalorder %s25, 0
      %s652 = scalar_select %p651, %s25, 0
      %s653 = sadd.s32 %s652, %s650
      %s654 = smul.addr %s648, 2
      %s655 = sadd.s32 %s653, %s654
      %s656 = smul.addr %s655, 8
      %s657 = scalar_lea.vmem %s5, %s656
      %p658 = scmp.lt.s32.totalorder %s23, 1
      %s659 = scalar_select %p658, %s23, 1
      %p660 = scmp.lt.s32.totalorder %s24, 1
      %s661 = scalar_select %p660, %s24, 1
      %p662 = scmp.lt.s32.totalorder %s25, 0
      %s663 = scalar_select %p662, %s25, 0
      %s664 = sadd.s32 %s663, %s661
      %s665 = smul.addr %s659, 2
      %s666 = sadd.s32 %s664, %s665
      %s667 = smul.addr %s666, 8
      %s668 = scalar_lea.vmem %s6, %s667
      // Predicated region
      $region37: #{tpu_custom_call.1} parent=35 // pred_check
        %p669 = pneg %p165
      $region38: #{tpu_custom_call.1} parent=35 // pred_check_branch
        %671 = sbr.rel (%p669) target = $region40
      $region39: #{tpu_custom_call.1} parent=35 // pred_region
        _
      $region40: #{tpu_custom_call.1} parent=35 // pred_fallthru
        _
      // Predicated region
      $region41: #{tpu_custom_call.1} parent=35 // pred_check
        %p672 = pneg %p195
      $region42: #{tpu_custom_call.1} parent=35 // pred_check_branch
        %674 = sbr.rel (%p672) target = $region44
      $region43: #{tpu_custom_call.1} parent=35 // pred_region
        _
      $region44: #{tpu_custom_call.1} parent=35 // pred_fallthru
        _
      // Predicated region
      $region45: #{tpu_custom_call.1} parent=35 // pred_check
        %p675 = pneg %p225
      $region46: #{tpu_custom_call.1} parent=35 // pred_check_branch
        %677 = sbr.rel (%p675) target = $region48
      $region47: #{tpu_custom_call.1} parent=35 // pred_region
        _
      $region48: #{tpu_custom_call.1} parent=35 // pred_fallthru
        _
    $region36: #{tpu_custom_call.1} parent=5 // pred_fallthru
      _
    %p678 = scmp.le.s32.totalorder 2, %s13
    // Predicated region
    $region49: #{tpu_custom_call.1} parent=5 // pred_check
      %p679 = pneg %p678
    $region50: #{tpu_custom_call.1} parent=5 // pred_check_branch
      %681 = sbr.rel (%p679) target = $region52
    $region51: #{tpu_custom_call.1} parent=5 // pred_region
      %s682 = ssub.s32 %s13, 2
      // Predicated region
      $region53: #{tpu_custom_call.1} parent=51 // pred_check
        %p683 = pneg %p171
      $region54: #{tpu_custom_call.1} parent=51 // pred_check_branch
        %685 = sbr.rel (%p683) target = $region56
      $region55: #{tpu_custom_call.1} parent=51 // pred_region
        %p686 = scmp.lt.s32.totalorder %s26, 1
        %s687 = scalar_select %p686, %s26, 1
        %p688 = scmp.lt.s32.totalorder %s27, 1
        %s689 = scalar_select %p688, %s27, 1
        %p690 = scmp.lt.s32.totalorder %s28, 0
        %s691 = scalar_select %p690, %s28, 0
        %s692 = sadd.s32 %s691, %s689
        %s693 = smul.addr %s687, 2
        %s694 = sadd.s32 %s692, %s693
        %s695 = smul.addr %s694, 8
        %s696 = scalar_lea.vmem %s4, %s695
      $region56: #{tpu_custom_call.1} parent=51 // pred_fallthru
        _
      // Predicated region
      $region57: #{tpu_custom_call.1} parent=51 // pred_check
        %p697 = pneg %p201
      $region58: #{tpu_custom_call.1} parent=51 // pred_check_branch
        %699 = sbr.rel (%p697) target = $region60
      $region59: #{tpu_custom_call.1} parent=51 // pred_region
        %p700 = scmp.lt.s32.totalorder %s26, 1
        %s701 = scalar_select %p700, %s26, 1
        %p702 = scmp.lt.s32.totalorder %s27, 1
        %s703 = scalar_select %p702, %s27, 1
        %p704 = scmp.lt.s32.totalorder %s28, 0
        %s705 = scalar_select %p704, %s28, 0
        %s706 = sadd.s32 %s705, %s703
        %s707 = smul.addr %s701, 2
        %s708 = sadd.s32 %s706, %s707
        %s709 = smul.addr %s708, 8
        %s710 = scalar_lea.vmem %s5, %s709
      $region60: #{tpu_custom_call.1} parent=51 // pred_fallthru
        _
      // Predicated region
      $region61: #{tpu_custom_call.1} parent=51 // pred_check
        %p711 = pneg %p231
      $region62: #{tpu_custom_call.1} parent=51 // pred_check_branch
        %713 = sbr.rel (%p711) target = $region64
      $region63: #{tpu_custom_call.1} parent=51 // pred_region
        %p714 = scmp.lt.s32.totalorder %s26, 1
        %s715 = scalar_select %p714, %s26, 1
        %p716 = scmp.lt.s32.totalorder %s27, 1
        %s717 = scalar_select %p716, %s27, 1
        %p718 = scmp.lt.s32.totalorder %s28, 0
        %s719 = scalar_select %p718, %s28, 0
        %s720 = sadd.s32 %s719, %s717
        %s721 = smul.addr %s715, 2
        %s722 = sadd.s32 %s720, %s721
        %s723 = smul.addr %s722, 8
        %s724 = scalar_lea.vmem %s6, %s723
      $region64: #{tpu_custom_call.1} parent=51 // pred_fallthru
        _
    $region52: #{tpu_custom_call.1} parent=5 // pred_fallthru
      _
  $region6: #{tpu_custom_call.1} parent=0 // loop_footer
    %s17 = sadd.s32 1, %s13
  $region7: #{tpu_custom_call.1} parent=0 // loop_footer_branch
    %12 = sbr.rel target = $region3
  $region8: #{tpu_custom_call.1} parent=0 // loop_exit
    _

</llo_original>
